<compile_context>
chip_gen: v7x
topology: tpu7x:2x2x1
jax: 0.10.0
libtpu: 0.0.40
codegen_flags: <defaults>
</compile_context>

<pallas_src>
import jax
import jax.numpy as jnp
from jax.experimental import pallas as pl
from jax.experimental.pallas import tpu as pltpu

BN_EPS = 1e-5
D_PAD = 128            # lane-dense feature padding (128 is correct for these widths)
NEG_INF_BIAS = -1e30   # kills padded softmax lanes (exp -> 0)


def make_densenet_kernel(num_inner_layers: int):
    """Kernel for `num_inner_layers` (Linear+BN+ReLU) layers followed by one
    head (Linear+Softmax) layer.

    Inputs (all lane-padded to 128):
        x_ref    : (TB, 128) f32 activations
        w_ref    : (L+1, 128, 128) bf16 stacked weights (pre-transposed, x @ W)
        vecs_ref : (8, 128) f32 packed rows [g_0, b_0, g_1, b_1, ..., head_bias, pad]
        out_ref  : (TB, 128) f32 softmax output (padded lanes ~ 0)
    """

    def kernel(x_ref, w_ref, vecs_ref, out_ref):
        x = x_ref[...].astype(jnp.float32)
        vecs = vecs_ref[...]

        # ---- inner layers: Linear (bias folded away by BN) -> BN -> ReLU ----
        for l in range(num_inner_layers):
            w = w_ref[l]                                   # (128, 128) bf16
            y = jnp.dot(x.astype(jnp.bfloat16), w,
                        preferred_element_type=jnp.float32)
            # training-mode BatchNorm1d, two-pass biased variance (f32)
            mean = jnp.mean(y, axis=0, keepdims=True)
            yc = y - mean
            var = jnp.mean(yc * yc, axis=0, keepdims=True)
            g = vecs[2 * l:2 * l + 1, :]
            be = vecs[2 * l + 1:2 * l + 2, :]
            s = g * jax.lax.rsqrt(var + BN_EPS)
            x = jnp.maximum(yc * s + be, 0.0)              # fused BN + ReLU

        # ---- head layer: Linear -> Softmax over lanes ----
        w = w_ref[num_inner_layers]
        hb = vecs[2 * num_inner_layers:2 * num_inner_layers + 1, :]
        y = jnp.dot(x.astype(jnp.bfloat16), w,
                    preferred_element_type=jnp.float32) + hb
        m = jnp.max(y, axis=1, keepdims=True)
        e = jnp.exp(y - m)
        denom = jnp.sum(e, axis=1, keepdims=True)
        r = pl.reciprocal(denom, approx=True)              # EUP vrcp (free slot)
        r = r * (2.0 - denom * r)                          # one Newton step -> ~f32 exact
        out_ref[...] = (e * r).astype(out_ref.dtype)

    return kernel


def init_densenet_params(key, layer_sizes):
    """Deterministic parameter init matching the PyTorch module's shapes.

    Flat list:
      inner layers: [W (in,out), b (1,out), gamma (1,out), beta (1,out)] * n_inner
      head layer:   [W (in,out), b (1,out)]
    (weights stored pre-transposed so forward computes x @ W)
    """
    params = []
    n_layers = len(layer_sizes) - 1
    for i in range(n_layers):
        fan_in, fan_out = layer_sizes[i], layer_sizes[i + 1]
        key, kw, kb, kg, kbe = jax.random.split(key, 5)
        bound = 1.0 / jnp.sqrt(fan_in)
        w = jax.random.uniform(kw, (fan_in, fan_out), jnp.float32, -bound, bound)
        b = jax.random.uniform(kb, (1, fan_out), jnp.float32, -bound, bound)
        params.append(w)
        params.append(b)
        if i != n_layers - 1:
            gamma = 1.0 + 0.1 * jax.random.normal(kg, (1, fan_out), jnp.float32)
            beta = 0.1 * jax.random.normal(kbe, (1, fan_out), jnp.float32)
            params.append(gamma)
            params.append(beta)
    return params


def pack_params(params, layer_sizes, d_pad=D_PAD):
    """Pad every weight to (d_pad, d_pad), cast to bf16 and STACK into a single
    (L+1, d_pad, d_pad) tensor (one kernel input / one DMA). Pack all
    per-feature vectors into one (8, d_pad) f32 array. Inner linear biases are
    dropped (exactly cancelled by training-mode BN mean subtraction). Head-bias
    padding is -1e30 so padded softmax lanes vanish."""
    num_inner = len(layer_sizes) - 2
    n_layers = num_inner + 1
    idx = 0
    w_padded = []
    vec_rows = []
    for l in range(n_layers):
        fan_in, fan_out = layer_sizes[l], layer_sizes[l + 1]
        w = params[idx]
        b = params[idx + 1]
        idx += 2
        wp = jnp.zeros((d_pad, d_pad), jnp.float32).at[:fan_in, :fan_out].set(w)
        w_padded.append(wp.astype(jnp.bfloat16))
        if l < num_inner:
            g = params[idx]
            be = params[idx + 1]
            idx += 2
            vec_rows.append(jnp.zeros((d_pad,), jnp.float32).at[:fan_out].set(g[0]))
            vec_rows.append(jnp.zeros((d_pad,), jnp.float32).at[:fan_out].set(be[0]))
        else:
            vec_rows.append(
                jnp.full((d_pad,), NEG_INF_BIAS, jnp.float32).at[:fan_out].set(b[0]))
    w_stack = jnp.stack(w_padded, axis=0)                    # (L+1, d_pad, d_pad) bf16
    n_rows = len(vec_rows)
    n_rows_pad = ((n_rows + 7) // 8) * 8
    vecs = jnp.zeros((n_rows_pad, d_pad), jnp.float32)
    for r, row in enumerate(vec_rows):
        vecs = vecs.at[r].set(row)
    return w_stack, vecs


def densenet_forward(x, params, layer_sizes, d_pad=D_PAD):
    """Wrapper: batch-tiled grid (TB == B so full-batch BN stats stay exact),
    one stacked-weights input + one packed-vectors input resident across the
    grid, lane-dense activations."""
    num_inner = len(layer_sizes) - 2
    n_layers = num_inner + 1
    B = x.shape[0]
    out_dim = layer_sizes[-1]
    TB = B  # training-mode BN batch statistics require the full batch in one tile

    w_stack, vecs = pack_params(params, layer_sizes, d_pad)
    x_pad = jnp.zeros((B, d_pad), jnp.float32).at[:, :layer_sizes[0]].set(
        x.astype(jnp.float32))

    kernel = make_densenet_kernel(num_inner)

    in_specs = [
        pl.BlockSpec((TB, d_pad), lambda i: (i, 0)),                 # x tile
        pl.BlockSpec((n_layers, d_pad, d_pad), lambda i: (0, 0, 0)),  # stacked weights
        pl.BlockSpec(vecs.shape, lambda i: (0, 0)),                   # packed vectors
    ]

    out = pl.pallas_call(
        kernel,
        out_shape=jax.ShapeDtypeStruct((B, d_pad), jnp.float32),
        grid=(B // TB,),
        in_specs=in_specs,
        out_specs=pl.BlockSpec((TB, d_pad), lambda i: (i, 0)),
        compiler_params=pltpu.CompilerParams(
            dimension_semantics=("parallel",)),
    )(x_pad, w_stack, vecs)

    return out[:, :out_dim]


def densenet_reference(x, params, layer_sizes):
    """Pure-JAX f32 reference matching the PyTorch module exactly (keeps the
    inner linear bias, two-pass variance, f32 matmuls)."""
    num_inner = len(layer_sizes) - 2
    idx = 0
    h = x.astype(jnp.float32)
    for _ in range(num_inner):
        w, b, g, be = params[idx], params[idx + 1], params[idx + 2], params[idx + 3]
        idx += 4
        y = h @ w + b
        mean = jnp.mean(y, axis=0, keepdims=True)
        var = jnp.mean((y - mean) ** 2, axis=0, keepdims=True)
        y = (y - mean) / jnp.sqrt(var + BN_EPS) * g + be
        h = jnp.maximum(y, 0.0)
    w, b = params[idx], params[idx + 1]
    y = h @ w + b
    return jax.nn.softmax(y, axis=1)


def densenet_reference_bf16ops(x, params, layer_sizes):
    """Reference that mirrors the kernel arithmetic (bf16 matmul operands with
    f32 accumulation, inner bias dropped under training-mode BN) — used for a
    tight numerical check of the Pallas kernel itself."""
    num_inner = len(layer_sizes) - 2
    idx = 0
    h = x.astype(jnp.float32)
    for _ in range(num_inner):
        w, _, g, be = params[idx], params[idx + 1], params[idx + 2], params[idx + 3]
        idx += 4
        y = jnp.dot(h.astype(jnp.bfloat16), w.astype(jnp.bfloat16),
                    preferred_element_type=jnp.float32)
        mean = jnp.mean(y, axis=0, keepdims=True)
        yc = y - mean
        var = jnp.mean(yc * yc, axis=0, keepdims=True)
        s = g * jax.lax.rsqrt(var + BN_EPS)
        h = jnp.maximum(yc * s + be, 0.0)
    w, b = params[idx], params[idx + 1]
    y = jnp.dot(h.astype(jnp.bfloat16), w.astype(jnp.bfloat16),
                preferred_element_type=jnp.float32) + b
    return jax.nn.softmax(y, axis=1)


if __name__ == "__main__":
    # DenseNet(layer_sizes=[32, 64, 32, 8]) applied to a (batch=8, 32) input.
    layer_sizes = [32, 64, 32, 8]
    batch = 8

    key = jax.random.PRNGKey(0)
    key, kx, kp = jax.random.split(key, 3)
    x = jax.random.normal(kx, (batch, layer_sizes[0]), jnp.float32)
    params = init_densenet_params(kp, layer_sizes)

    out = densenet_forward(x, params, layer_sizes)
    out = jax.block_until_ready(out)
    assert out.shape == (batch, layer_sizes[-1])

    # Tight check vs. a reference that uses the same bf16-operand arithmetic.
    ref_bf16 = densenet_reference_bf16ops(x, params, layer_sizes)
    assert jnp.allclose(out, ref_bf16, atol=2e-3, rtol=2e-3), \
        "mismatch vs bf16-operand JAX reference"

    # Looser check vs. the exact f32 PyTorch-semantics reference (tolerance
    # reflects the bf16 MXU operand cast requested by the perf review).
    ref_f32 = densenet_reference(x, params, layer_sizes)
    assert jnp.allclose(out, ref_f32, atol=2e-2, rtol=2e-2), \
        "mismatch vs f32 JAX reference"

    # Newton-refined approx reciprocal keeps the softmax rows summing to 1.
    assert jnp.allclose(jnp.sum(out, axis=1), 1.0, atol=1e-5), \
        "softmax rows must sum to 1"

    print("KERNEL_OK")
</pallas_src>

<mosaic_0001>
module attributes {stable_mosaic.version = 11 : i64} {
  func.func @kernel(%arg0: i32, %arg1: memref<8x128xf32, #tpu.memory_space<vmem>>, %arg2: memref<3x128x128xbf16, #tpu.memory_space<vmem>>, %arg3: memref<8x128xf32, #tpu.memory_space<vmem>>, %arg4: memref<8x128xf32, #tpu.memory_space<vmem>>) attributes {dimension_semantics = [#tpu.dimension_semantics<parallel>], iteration_bounds = array<i64: 1>, scalar_prefetch = 0 : i64, scratch_operands = 0 : i64, tpu.core_type = #tpu.core_type<tc>, window_params = [{transform_indices = @transform_0, window_bounds = array<i64: 8, 128>}, {pipeline_mode = #tpu.pipeline_mode<synchronous>, transform_indices = @transform_1, window_bounds = array<i64: 3, 128, 128>}, {pipeline_mode = #tpu.pipeline_mode<synchronous>, transform_indices = @transform_2, window_bounds = array<i64: 8, 128>}, {transform_indices = @transform_3, window_bounds = array<i64: 8, 128>}]} {
    %c0 = arith.constant 0 : index
    %c0_0 = arith.constant 0 : index
    %0 = vector.load %arg1[%c0, %c0_0] : memref<8x128xf32, #tpu.memory_space<vmem>>, vector<8x128xf32>
    %c0_1 = arith.constant 0 : index
    %c0_2 = arith.constant 0 : index
    %1 = vector.load %arg3[%c0_1, %c0_2] : memref<8x128xf32, #tpu.memory_space<vmem>>, vector<8x128xf32>
    %c0_3 = arith.constant 0 : index
    %c0_4 = arith.constant 0 : index
    %c0_5 = arith.constant 0 : index
    %2 = vector.load %arg2[%c0_3, %c0_4, %c0_5] : memref<3x128x128xbf16, #tpu.memory_space<vmem>>, vector<1x128x128xbf16>
    %3 = vector.shape_cast %2 : vector<1x128x128xbf16> to vector<128x128xbf16>
    %4 = arith.truncf %0 : vector<8x128xf32> to vector<8x128xbf16>
    %cst = arith.constant dense<0.000000e+00> : vector<8x128xf32>
    %5 = tpu.matmul %4, %3, %cst {dimension_numbers = #tpu.dot_dimension_numbers<[1], [0], [0], [1], [0, 0, 1, 1], [], []>} : vector<8x128xbf16>, vector<128x128xbf16>, vector<8x128xf32> -> vector<8x128xf32>
    %cst_6 = arith.constant dense<0.000000e+00> : vector<128xf32>
    %6 = vector.multi_reduction <add>, %5, %cst_6 [0] : vector<8x128xf32> to vector<128xf32>
    %7 = vector.shape_cast %6 : vector<128xf32> to vector<1x128xf32>
    %cst_7 = arith.constant 8.000000e+00 : f32
    %8 = vector.broadcast %cst_7 : f32 to vector<1x128xf32>
    %9 = arith.divf %7, %8 : vector<1x128xf32>
    %10 = vector.broadcast %9 : vector<1x128xf32> to vector<8x128xf32>
    %11 = arith.subf %5, %10 : vector<8x128xf32>
    %12 = arith.mulf %11, %11 : vector<8x128xf32>
    %cst_8 = arith.constant dense<0.000000e+00> : vector<128xf32>
    %13 = vector.multi_reduction <add>, %12, %cst_8 [0] : vector<8x128xf32> to vector<128xf32>
    %14 = vector.shape_cast %13 : vector<128xf32> to vector<1x128xf32>
    %cst_9 = arith.constant 8.000000e+00 : f32
    %15 = vector.broadcast %cst_9 : f32 to vector<1x128xf32>
    %16 = arith.divf %14, %15 : vector<1x128xf32>
    %17 = vector.extract_strided_slice %1 {offsets = [0, 0], sizes = [1, 128], strides = [1, 1]} : vector<8x128xf32> to vector<1x128xf32>
    %18 = vector.extract_strided_slice %1 {offsets = [1, 0], sizes = [1, 128], strides = [1, 1]} : vector<8x128xf32> to vector<1x128xf32>
    %cst_10 = arith.constant 9.99999974E-6 : f32
    %19 = vector.broadcast %cst_10 : f32 to vector<1x128xf32>
    %20 = arith.addf %16, %19 : vector<1x128xf32>
    %21 = math.rsqrt %20 : vector<1x128xf32>
    %22 = arith.mulf %17, %21 : vector<1x128xf32>
    %23 = vector.broadcast %22 : vector<1x128xf32> to vector<8x128xf32>
    %24 = arith.mulf %11, %23 : vector<8x128xf32>
    %25 = vector.broadcast %18 : vector<1x128xf32> to vector<8x128xf32>
    %26 = arith.addf %24, %25 : vector<8x128xf32>
    %cst_11 = arith.constant 0.000000e+00 : f32
    %27 = vector.broadcast %cst_11 : f32 to vector<8x128xf32>
    %28 = arith.maximumf %26, %27 : vector<8x128xf32>
    %c1 = arith.constant 1 : index
    %c0_12 = arith.constant 0 : index
    %c0_13 = arith.constant 0 : index
    %29 = vector.load %arg2[%c1, %c0_12, %c0_13] : memref<3x128x128xbf16, #tpu.memory_space<vmem>>, vector<1x128x128xbf16>
    %30 = vector.shape_cast %29 : vector<1x128x128xbf16> to vector<128x128xbf16>
    %31 = arith.truncf %28 : vector<8x128xf32> to vector<8x128xbf16>
    %cst_14 = arith.constant dense<0.000000e+00> : vector<8x128xf32>
    %32 = tpu.matmul %31, %30, %cst_14 {dimension_numbers = #tpu.dot_dimension_numbers<[1], [0], [0], [1], [0, 0, 1, 1], [], []>} : vector<8x128xbf16>, vector<128x128xbf16>, vector<8x128xf32> -> vector<8x128xf32>
    %cst_15 = arith.constant dense<0.000000e+00> : vector<128xf32>
    %33 = vector.multi_reduction <add>, %32, %cst_15 [0] : vector<8x128xf32> to vector<128xf32>
    %34 = vector.shape_cast %33 : vector<128xf32> to vector<1x128xf32>
    %cst_16 = arith.constant 8.000000e+00 : f32
    %35 = vector.broadcast %cst_16 : f32 to vector<1x128xf32>
    %36 = arith.divf %34, %35 : vector<1x128xf32>
    %37 = vector.broadcast %36 : vector<1x128xf32> to vector<8x128xf32>
    %38 = arith.subf %32, %37 : vector<8x128xf32>
    %39 = arith.mulf %38, %38 : vector<8x128xf32>
    %cst_17 = arith.constant dense<0.000000e+00> : vector<128xf32>
    %40 = vector.multi_reduction <add>, %39, %cst_17 [0] : vector<8x128xf32> to vector<128xf32>
    %41 = vector.shape_cast %40 : vector<128xf32> to vector<1x128xf32>
    %cst_18 = arith.constant 8.000000e+00 : f32
    %42 = vector.broadcast %cst_18 : f32 to vector<1x128xf32>
    %43 = arith.divf %41, %42 : vector<1x128xf32>
    %44 = vector.extract_strided_slice %1 {offsets = [2, 0], sizes = [1, 128], strides = [1, 1]} : vector<8x128xf32> to vector<1x128xf32>
    %45 = vector.extract_strided_slice %1 {offsets = [3, 0], sizes = [1, 128], strides = [1, 1]} : vector<8x128xf32> to vector<1x128xf32>
    %cst_19 = arith.constant 9.99999974E-6 : f32
    %46 = vector.broadcast %cst_19 : f32 to vector<1x128xf32>
    %47 = arith.addf %43, %46 : vector<1x128xf32>
    %48 = math.rsqrt %47 : vector<1x128xf32>
    %49 = arith.mulf %44, %48 : vector<1x128xf32>
    %50 = vector.broadcast %49 : vector<1x128xf32> to vector<8x128xf32>
    %51 = arith.mulf %38, %50 : vector<8x128xf32>
    %52 = vector.broadcast %45 : vector<1x128xf32> to vector<8x128xf32>
    %53 = arith.addf %51, %52 : vector<8x128xf32>
    %cst_20 = arith.constant 0.000000e+00 : f32
    %54 = vector.broadcast %cst_20 : f32 to vector<8x128xf32>
    %55 = arith.maximumf %53, %54 : vector<8x128xf32>
    %c2 = arith.constant 2 : index
    %c0_21 = arith.constant 0 : index
    %c0_22 = arith.constant 0 : index
    %56 = vector.load %arg2[%c2, %c0_21, %c0_22] : memref<3x128x128xbf16, #tpu.memory_space<vmem>>, vector<1x128x128xbf16>
    %57 = vector.shape_cast %56 : vector<1x128x128xbf16> to vector<128x128xbf16>
    %58 = vector.extract_strided_slice %1 {offsets = [4, 0], sizes = [1, 128], strides = [1, 1]} : vector<8x128xf32> to vector<1x128xf32>
    %59 = arith.truncf %55 : vector<8x128xf32> to vector<8x128xbf16>
    %cst_23 = arith.constant dense<0.000000e+00> : vector<8x128xf32>
    %60 = tpu.matmul %59, %57, %cst_23 {dimension_numbers = #tpu.dot_dimension_numbers<[1], [0], [0], [1], [0, 0, 1, 1], [], []>} : vector<8x128xbf16>, vector<128x128xbf16>, vector<8x128xf32> -> vector<8x128xf32>
    %61 = vector.broadcast %58 : vector<1x128xf32> to vector<8x128xf32>
    %62 = arith.addf %60, %61 : vector<8x128xf32>
    %cst_24 = arith.constant dense<0xFF800000> : vector<8xf32>
    %63 = vector.multi_reduction <maximumf>, %62, %cst_24 [1] : vector<8x128xf32> to vector<8xf32>
    %64 = vector.shape_cast %63 : vector<8xf32> to vector<8x1xf32>
    %65 = vector.broadcast %64 : vector<8x1xf32> to vector<8x128xf32>
    %66 = arith.subf %62, %65 : vector<8x128xf32>
    %67 = math.exp %66 : vector<8x128xf32>
    %cst_25 = arith.constant dense<0.000000e+00> : vector<8xf32>
    %68 = vector.multi_reduction <add>, %67, %cst_25 [1] : vector<8x128xf32> to vector<8xf32>
    %69 = vector.shape_cast %68 : vector<8xf32> to vector<8x1xf32>
    %70 = tpu.reciprocal %69 {approx = true} : vector<8x1xf32> -> vector<8x1xf32>
    %71 = arith.mulf %69, %70 : vector<8x1xf32>
    %cst_26 = arith.constant 2.000000e+00 : f32
    %72 = vector.broadcast %cst_26 : f32 to vector<8x1xf32>
    %73 = arith.subf %72, %71 : vector<8x1xf32>
    %74 = arith.mulf %70, %73 : vector<8x1xf32>
    %75 = vector.broadcast %74 : vector<8x1xf32> to vector<8x128xf32>
    %76 = arith.mulf %67, %75 : vector<8x128xf32>
    %c0_27 = arith.constant 0 : index
    %c0_28 = arith.constant 0 : index
    %77 = vector.load %arg4[%c0_27, %c0_28] : memref<8x128xf32, #tpu.memory_space<vmem>>, vector<8x128xf32>
    tpu.vector_store %arg4[%c0_27, %c0_28], %76 {strides = array<i32>} : memref<8x128xf32, #tpu.memory_space<vmem>>, vector<8x128xf32>,
    return
  }
  func.func @transform_0(%arg0: i32) -> (i32, i32) {
    %c0_i32 = arith.constant 0 : i32
    %c0_i32_0 = arith.constant 0 : i32
    return %arg0, %c0_i32 : i32, i32
  }
  func.func @transform_1(%arg0: i32) -> (i32, i32, i32) {
    %c0_i32 = arith.constant 0 : i32
    %c0_i32_0 = arith.constant 0 : i32
    %c0_i32_1 = arith.constant 0 : i32
    %c0_i32_2 = arith.constant 0 : i32
    return %c0_i32, %c0_i32_0, %c0_i32_1 : i32, i32, i32
  }
  func.func @transform_2(%arg0: i32) -> (i32, i32) {
    %c0_i32 = arith.constant 0 : i32
    %c0_i32_0 = arith.constant 0 : i32
    %c0_i32_1 = arith.constant 0 : i32
    return %c0_i32, %c0_i32_0 : i32, i32
  }
  func.func @transform_3(%arg0: i32) -> (i32, i32) {
    %c0_i32 = arith.constant 0 : i32
    %c0_i32_0 = arith.constant 0 : i32
    return %arg0, %c0_i32 : i32, i32
  }
}

</mosaic_0001>

<llo_original>
// kernel: tpu_custom_call.1
$region0: #{tpu_custom_call.1}
  #allocation0 [shape = 'u32[]', space=smem, size = 0x4, offset = 0x4, fixed_abs, tag = 'smem constant byte address 0x4 - core index']
  #allocation1 [shape = 'u32[144,128]{1,0:T(1,128)}', space=vmem, size = 0x12000, scoped, tag = 'internal scratch']
  %s0 = inlined_call_operand.hbm [shape: f32[8,128], index: 0, kind: input, shape index: {}]
  %s1 = inlined_call_operand.hbm [shape: bf16[3,128,128], index: 1, kind: input, shape index: {}]
  %s2 = inlined_call_operand.hbm [shape: f32[8,128], index: 2, kind: input, shape index: {}]
  %s3 = inlined_call_operand.hbm [shape: f32[8,128], index: 3, kind: output, shape index: {}]
  %s4 = sld [smem:[#allocation0]]
  $region34: #{tpu_custom_call.1} parent=0
    _
  %s6 = ssub.s32 1, %s4
  %s7 = scalar_select 0, %s6, %s4
  $region1: #{tpu_custom_call.1} parent=0
    #allocation2 [shape = 'u8[4096]{0}', space=vmem, size = 0x1000, scoped, tag = 'input window, operand 0, single buffered']
    #allocation3 [shape = 's32[1]{0}', space=sflag, size = 0x4, scoped, tag = 'scoped memory for tpu_custom_call.1']
    #allocation4 [shape = 's32[1]{0}', space=sflag, size = 0x4, scoped, tag = 'scoped memory for tpu_custom_call.1']
    #allocation5 [shape = 'u8[98304]{0}', space=vmem, size = 0x18000, scoped, tag = 'input window, operand 1, single buffered']
    #allocation6 [shape = 's32[1]{0}', space=sflag, size = 0x4, scoped, tag = 'scoped memory for tpu_custom_call.1']
    #allocation7 [shape = 'u8[4096]{0}', space=vmem, size = 0x1000, scoped, tag = 'input window, operand 2, single buffered']
    #allocation8 [shape = 'u8[4096]{0}', space=vmem, size = 0x1000, scoped, tag = 'output window, operand 0, single buffered']
    %8 = vsyncpa [#allocation3], 0
    %9 = vsyncpa [#allocation6], 0
    %10 = vsyncpa [#allocation4], 0
    // Predicated region
    $region2: #{tpu_custom_call.1} parent=1 // pred_check
      _
    $region3: #{tpu_custom_call.1} parent=1 // pred_check_branch
      %12 = sbr.rel (0) target = $region5
    $region4: #{tpu_custom_call.1} parent=1 // pred_region
      %s14 = ssub.s32 128, 128
      %15 = vsyncadd [#allocation3], %s14
      %s17 = sshll.u32 [#allocation2], 4
      %s18 = int_to_ptr.vmem [resolvable:$true] %s17
      %20 = dma.hbm_to_vmem [thread:$0]  %s0, 128, %s18, [#allocation3]
    $region5: #{tpu_custom_call.1} parent=1 // pred_fallthru
      _
    // Predicated region
    $region6: #{tpu_custom_call.1} parent=1 // pred_check
      _
    $region7: #{tpu_custom_call.1} parent=1 // pred_check_branch
      %22 = sbr.rel (0) target = $region9
    $region8: #{tpu_custom_call.1} parent=1 // pred_region
      %s24 = ssub.s32 3072, 3072
      %25 = vsyncadd [#allocation6], %s24
      %s26 = sshll.u32 [#allocation5], 4
      %s27 = int_to_ptr.vmem [resolvable:$true] %s26
      %32 = dma.hbm_to_vmem [thread:$0]  %s1, 3072, %s27, [#allocation6], 64, 64, 4
    $region9: #{tpu_custom_call.1} parent=1 // pred_fallthru
      _
    // Predicated region
    $region10: #{tpu_custom_call.1} parent=1 // pred_check
      _
    $region11: #{tpu_custom_call.1} parent=1 // pred_check_branch
      %34 = sbr.rel (0) target = $region13
    $region12: #{tpu_custom_call.1} parent=1 // pred_region
      %s36 = ssub.s32 128, 128
      %37 = vsyncadd [#allocation6], %s36
      %s39 = sshll.u32 [#allocation7], 4
      %s40 = int_to_ptr.vmem [resolvable:$true] %s39
      %42 = dma.hbm_to_vmem [thread:$0]  %s2, 128, %s40, [#allocation6]
    $region13: #{tpu_custom_call.1} parent=1 // pred_fallthru
      _
    // Predicated region
    $region14: #{tpu_custom_call.1} parent=1 // pred_check
      _
    $region15: #{tpu_custom_call.1} parent=1 // pred_check_branch
      %44 = sbr.rel (0) target = $region17
    $region16: #{tpu_custom_call.1} parent=1 // pred_region
      %45 = dma.done [#allocation3], 128
    $region17: #{tpu_custom_call.1} parent=1 // pred_fallthru
      _
    // Predicated region
    $region18: #{tpu_custom_call.1} parent=1 // pred_check
      _
    $region19: #{tpu_custom_call.1} parent=1 // pred_check_branch
      %47 = sbr.rel (0) target = $region21
    $region20: #{tpu_custom_call.1} parent=1 // pred_region
      %48 = dma.done [#allocation6], 3072
    $region21: #{tpu_custom_call.1} parent=1 // pred_fallthru
      _
    // Predicated region
    $region22: #{tpu_custom_call.1} parent=1 // pred_check
      _
    $region23: #{tpu_custom_call.1} parent=1 // pred_check_branch
      %50 = sbr.rel (0) target = $region25
    $region24: #{tpu_custom_call.1} parent=1 // pred_region
      %51 = dma.done [#allocation6], 128
    $region25: #{tpu_custom_call.1} parent=1 // pred_fallthru
      _
    %v53 = vld [vmem:[#allocation2] sm:$0xff]
    %v54 = vld [vmem:[#allocation7] sm:$0xff]
    %v55 = vld [vmem:[#allocation5] sm:$0xf]
    %v56 = vld [vmem:[#allocation5 + $0x4] sm:$0xf]
    %v57 = vld [vmem:[#allocation5 + $0x8] sm:$0xf]
    %v58 = vld [vmem:[#allocation5 + $0xc] sm:$0xf]
    %v59 = vld [vmem:[#allocation5 + $0x10] sm:$0xf]
    %v60 = vld [vmem:[#allocation5 + $0x14] sm:$0xf]
    %v61 = vld [vmem:[#allocation5 + $0x18] sm:$0xf]
    %v62 = vld [vmem:[#allocation5 + $0x1c] sm:$0xf]
    %v63 = vld [vmem:[#allocation5 + $0x20] sm:$0xf]
    %v64 = vld [vmem:[#allocation5 + $0x24] sm:$0xf]
    %v65 = vld [vmem:[#allocation5 + $0x28] sm:$0xf]
    %v66 = vld [vmem:[#allocation5 + $0x2c] sm:$0xf]
    %v67 = vld [vmem:[#allocation5 + $0x30] sm:$0xf]
    %v68 = vld [vmem:[#allocation5 + $0x34] sm:$0xf]
    %v69 = vld [vmem:[#allocation5 + $0x38] sm:$0xf]
    %v70 = vld [vmem:[#allocation5 + $0x3c] sm:$0xf]
    %v71 = vpack.c.bf16 %v53, %v53
    %v88 = vunpack.c.l.b16 %v55
    %v89 = vunpack.c.l.b16 %v56
    %v90 = vunpack.c.l.b16 %v57
    %v91 = vunpack.c.l.b16 %v58
    %v92 = vunpack.c.l.b16 %v59
    %v93 = vunpack.c.l.b16 %v60
    %v94 = vunpack.c.l.b16 %v61
    %v95 = vunpack.c.l.b16 %v62
    %v96 = vunpack.c.l.b16 %v63
    %v97 = vunpack.c.l.b16 %v64
    %v98 = vunpack.c.l.b16 %v65
    %v99 = vunpack.c.l.b16 %v66
    %v100 = vunpack.c.l.b16 %v67
    %v101 = vunpack.c.l.b16 %v68
    %v102 = vunpack.c.l.b16 %v69
    %v103 = vunpack.c.l.b16 %v70
    %v104 = vpack.c.b16 %v89, %v88
    %v105 = vpack.c.b16 %v91, %v90
    %v106 = vpack.c.b16 %v93, %v92
    %v107 = vpack.c.b16 %v95, %v94
    %v108 = vpack.c.b16 %v97, %v96
    %v109 = vpack.c.b16 %v99, %v98
    %v110 = vpack.c.b16 %v101, %v100
    %v111 = vpack.c.b16 %v103, %v102
    %120 = vmatprep.subr.bf16.mxu0 0
    %121 = vmatpush1.bf16.msra.mxu0 %v104
    %122 = vmatprep.subr.bf16.mxu0 0
    %123 = vmatpush1.bf16.msra.mxu0 %v105
    %124 = vmatprep.subr.bf16.mxu0 0
    %125 = vmatpush1.bf16.msra.mxu0 %v106
    %126 = vmatprep.subr.bf16.mxu0 0
    %127 = vmatpush1.bf16.msra.mxu0 %v107
    %128 = vmatprep.subr.bf16.mxu0 0
    %129 = vmatpush1.bf16.msra.mxu0 %v108
    %130 = vmatprep.subr.bf16.mxu0 0
    %131 = vmatpush1.bf16.msra.mxu0 %v109
    %132 = vmatprep.subr.bf16.mxu0 0
    %133 = vmatpush1.bf16.msra.mxu0 %v110
    %134 = vmatprep.subr.bf16.mxu0 0
    %135 = vmatpush1.bf16.msra.mxu0 %v111
    %136 = vmatprep.subr.bf16.mxu0 0
    %137 = vmatpush1.bf16.msra.mxu0 0
    %138 = vmatprep.subr.bf16.mxu0 0
    %139 = vmatpush1.bf16.msra.mxu0 0
    %140 = vmatprep.subr.bf16.mxu0 0
    %141 = vmatpush1.bf16.msra.mxu0 0
    %142 = vmatprep.subr.bf16.mxu0 0
    %143 = vmatpush1.bf16.msra.mxu0 0
    %144 = vmatprep.subr.bf16.mxu0 0
    %145 = vmatpush1.bf16.msra.mxu0 0
    %146 = vmatprep.subr.bf16.mxu0 0
    %147 = vmatpush1.bf16.msra.mxu0 0
    %148 = vmatprep.subr.bf16.mxu0 0
    %149 = vmatpush1.bf16.msra.mxu0 0
    %150 = vmatprep.subr.bf16.mxu0 0
    %151 = vmatpush1.bf16.msra.mxu0 0
    %152 = vmatprep.mubr.bf16.mxu0 0
    %153 = vmatmul.mubr.bf16.gmra.mrb[0].mxu0 %v71
    %v154 = vpop.f32.mrb[0].mxu0
    %v155 = vadd.f32 0.0, %v154
    %v156 = vpop.f32.mrb[0].mxu0
    %v157 = vpop.f32.mrb[0].mxu0
    %v158 = vpop.f32.mrb[0].mxu0
    %159 = vdwg.mxu0
    %v160 = vrot.slane %v155, 4
    %v161 = vadd.f32 %v155, %v160
    %v162 = vrot.slane %v161, 2
    %v163 = vadd.f32 %v161, %v162
    %v164 = vrot.slane %v163, 1
    %v165 = vadd.f32 %v163, %v164
    %v166 = vrcp.pop 8.0
    %v167 = vmul.f32 %v165, %v166
    %v168 = vsub.f32 %v155, %v167
    %v169 = vmul.f32 %v168, %v168
    %v170 = vrot.slane %v169, 4
    %v171 = vadd.f32 %v169, %v170
    %v172 = vrot.slane %v171, 2
    %v173 = vadd.f32 %v171, %v172
    %v174 = vrot.slane %v173, 1
    %v175 = vadd.f32 %v173, %v174
    %v176 = vmul.f32 %v175, %v166
    %v177 = vadd.f32 %v176, 1e-05
    %v178 = vrsqrt.pop %v177
    %v179 = vmul.f32 %v54, %v178
    %v180 = vlaneseq
    %v181 = vshrl.u32 %v180, 7
    %v182 = vsub.s32 0, %v181
    %v183 = vrot.slane %v179, %v182
    %v184 = vmul.f32 %v168, %v183
    %v185 = vlaneseq
    %v186 = vshrl.u32 %v185, 7
    %v187 = vsub.s32 1, %v186
    %v188 = vrot.slane %v54, %v187
    %v189 = vadd.f32 %v184, %v188
    %v190 = vmax.f32 %v189, 0.0
    %s191 = scalar_lea.vmem [#allocation5], 64
    %v192 = vld [vmem:[%s191] sm:$0xf]
    %v193 = vld [vmem:[%s191 + $0x4] sm:$0xf]
    %v194 = vld [vmem:[%s191 + $0x8] sm:$0xf]
    %v195 = vld [vmem:[%s191 + $0xc] sm:$0xf]
    %v196 = vld [vmem:[%s191 + $0x10] sm:$0xf]
    %v197 = vld [vmem:[%s191 + $0x14] sm:$0xf]
    %v198 = vld [vmem:[%s191 + $0x18] sm:$0xf]
    %v199 = vld [vmem:[%s191 + $0x1c] sm:$0xf]
    %v200 = vld [vmem:[%s191 + $0x20] sm:$0xf]
    %v201 = vld [vmem:[%s191 + $0x24] sm:$0xf]
    %v202 = vld [vmem:[%s191 + $0x28] sm:$0xf]
    %v203 = vld [vmem:[%s191 + $0x2c] sm:$0xf]
    %v204 = vld [vmem:[%s191 + $0x30] sm:$0xf]
    %v205 = vld [vmem:[%s191 + $0x34] sm:$0xf]
    %v206 = vld [vmem:[%s191 + $0x38] sm:$0xf]
    %v207 = vld [vmem:[%s191 + $0x3c] sm:$0xf]
    %v208 = vpack.c.bf16 %v190, %v190
    %v225 = vunpack.c.l.b16 %v192
    %v226 = vunpack.c.l.b16 %v193
    %v227 = vunpack.c.l.b16 %v194
    %v228 = vunpack.c.l.b16 %v195
    %v229 = vunpack.c.l.b16 %v196
    %v230 = vunpack.c.l.b16 %v197
    %v231 = vunpack.c.l.b16 %v198
    %v232 = vunpack.c.l.b16 %v199
    %v233 = vunpack.c.l.b16 %v200
    %v234 = vunpack.c.l.b16 %v201
    %v235 = vunpack.c.l.b16 %v202
    %v236 = vunpack.c.l.b16 %v203
    %v237 = vunpack.c.l.b16 %v204
    %v238 = vunpack.c.l.b16 %v205
    %v239 = vunpack.c.l.b16 %v206
    %v240 = vunpack.c.l.b16 %v207
    %v241 = vpack.c.b16 %v226, %v225
    %v242 = vpack.c.b16 %v228, %v227
    %v243 = vpack.c.b16 %v230, %v229
    %v244 = vpack.c.b16 %v232, %v231
    %v245 = vpack.c.b16 %v234, %v233
    %v246 = vpack.c.b16 %v236, %v235
    %v247 = vpack.c.b16 %v238, %v237
    %v248 = vpack.c.b16 %v240, %v239
    %257 = vmatprep.subr.bf16.mxu0 0
    %258 = vmatpush1.bf16.msra.mxu0 %v241
    %259 = vmatprep.subr.bf16.mxu0 0
    %260 = vmatpush1.bf16.msra.mxu0 %v242
    %261 = vmatprep.subr.bf16.mxu0 0
    %262 = vmatpush1.bf16.msra.mxu0 %v243
    %263 = vmatprep.subr.bf16.mxu0 0
    %264 = vmatpush1.bf16.msra.mxu0 %v244
    %265 = vmatprep.subr.bf16.mxu0 0
    %266 = vmatpush1.bf16.msra.mxu0 %v245
    %267 = vmatprep.subr.bf16.mxu0 0
    %268 = vmatpush1.bf16.msra.mxu0 %v246
    %269 = vmatprep.subr.bf16.mxu0 0
    %270 = vmatpush1.bf16.msra.mxu0 %v247
    %271 = vmatprep.subr.bf16.mxu0 0
    %272 = vmatpush1.bf16.msra.mxu0 %v248
    %273 = vmatprep.subr.bf16.mxu0 0
    %274 = vmatpush1.bf16.msra.mxu0 0
    %275 = vmatprep.subr.bf16.mxu0 0
    %276 = vmatpush1.bf16.msra.mxu0 0
    %277 = vmatprep.subr.bf16.mxu0 0
    %278 = vmatpush1.bf16.msra.mxu0 0
    %279 = vmatprep.subr.bf16.mxu0 0
    %280 = vmatpush1.bf16.msra.mxu0 0
    %281 = vmatprep.subr.bf16.mxu0 0
    %282 = vmatpush1.bf16.msra.mxu0 0
    %283 = vmatprep.subr.bf16.mxu0 0
    %284 = vmatpush1.bf16.msra.mxu0 0
    %285 = vmatprep.subr.bf16.mxu0 0
    %286 = vmatpush1.bf16.msra.mxu0 0
    %287 = vmatprep.subr.bf16.mxu0 0
    %288 = vmatpush1.bf16.msra.mxu0 0
    %289 = vmatprep.mubr.bf16.mxu0 0
    %290 = vmatmul.mubr.bf16.gmra.mrb[0].mxu0 %v208
    %v291 = vpop.f32.mrb[0].mxu0
    %v292 = vadd.f32 0.0, %v291
    %v293 = vpop.f32.mrb[0].mxu0
    %v294 = vpop.f32.mrb[0].mxu0
    %v295 = vpop.f32.mrb[0].mxu0
    %296 = vdwg.mxu0
    %v297 = vrot.slane %v292, 4
    %v298 = vadd.f32 %v292, %v297
    %v299 = vrot.slane %v298, 2
    %v300 = vadd.f32 %v298, %v299
    %v301 = vrot.slane %v300, 1
    %v302 = vadd.f32 %v300, %v301
    %v303 = vmul.f32 %v302, %v166
    %v304 = vsub.f32 %v292, %v303
    %v305 = vmul.f32 %v304, %v304
    %v306 = vrot.slane %v305, 4
    %v307 = vadd.f32 %v305, %v306
    %v308 = vrot.slane %v307, 2
    %v309 = vadd.f32 %v307, %v308
    %v310 = vrot.slane %v309, 1
    %v311 = vadd.f32 %v309, %v310
    %v312 = vmul.f32 %v311, %v166
    %v313 = vadd.f32 %v312, 1e-05
    %v314 = vrsqrt.pop %v313
    %v315 = vmul.f32 %v54, %v314
    %v316 = vlaneseq
    %v317 = vshrl.u32 %v316, 7
    %v318 = vsub.s32 2, %v317
    %v319 = vrot.slane %v315, %v318
    %v320 = vmul.f32 %v304, %v319
    %v321 = vlaneseq
    %v322 = vshrl.u32 %v321, 7
    %v323 = vsub.s32 3, %v322
    %v324 = vrot.slane %v54, %v323
    %v325 = vadd.f32 %v320, %v324
    %v326 = vmax.f32 %v325, 0.0
    %s327 = scalar_lea.vmem [#allocation5], 128
    %v328 = vld [vmem:[%s327] sm:$0xf]
    %v329 = vld [vmem:[%s327 + $0x4] sm:$0xf]
    %v330 = vld [vmem:[%s327 + $0x8] sm:$0xf]
    %v331 = vld [vmem:[%s327 + $0xc] sm:$0xf]
    %v332 = vld [vmem:[%s327 + $0x10] sm:$0xf]
    %v333 = vld [vmem:[%s327 + $0x14] sm:$0xf]
    %v334 = vld [vmem:[%s327 + $0x18] sm:$0xf]
    %v335 = vld [vmem:[%s327 + $0x1c] sm:$0xf]
    %v336 = vld [vmem:[%s327 + $0x20] sm:$0xf]
    %v337 = vld [vmem:[%s327 + $0x24] sm:$0xf]
    %v338 = vld [vmem:[%s327 + $0x28] sm:$0xf]
    %v339 = vld [vmem:[%s327 + $0x2c] sm:$0xf]
    %v340 = vld [vmem:[%s327 + $0x30] sm:$0xf]
    %v341 = vld [vmem:[%s327 + $0x34] sm:$0xf]
    %v342 = vld [vmem:[%s327 + $0x38] sm:$0xf]
    %v343 = vld [vmem:[%s327 + $0x3c] sm:$0xf]
    %v344 = vpack.c.bf16 %v326, %v326
    %v345 = vlaneseq
    %v346 = vshrl.u32 %v345, 7
    %v347 = vsub.s32 4, %v346
    %v348 = vrot.slane %v54, %v347
    %v365 = vunpack.c.l.b16 %v328
    %v366 = vunpack.c.l.b16 %v329
    %v367 = vunpack.c.l.b16 %v330
    %v368 = vunpack.c.l.b16 %v331
    %v369 = vunpack.c.l.b16 %v332
    %v370 = vunpack.c.l.b16 %v333
    %v371 = vunpack.c.l.b16 %v334
    %v372 = vunpack.c.l.b16 %v335
    %v373 = vunpack.c.l.b16 %v336
    %v374 = vunpack.c.l.b16 %v337
    %v375 = vunpack.c.l.b16 %v338
    %v376 = vunpack.c.l.b16 %v339
    %v377 = vunpack.c.l.b16 %v340
    %v378 = vunpack.c.l.b16 %v341
    %v379 = vunpack.c.l.b16 %v342
    %v380 = vunpack.c.l.b16 %v343
    %v381 = vpack.c.b16 %v366, %v365
    %v382 = vpack.c.b16 %v368, %v367
    %v383 = vpack.c.b16 %v370, %v369
    %v384 = vpack.c.b16 %v372, %v371
    %v385 = vpack.c.b16 %v374, %v373
    %v386 = vpack.c.b16 %v376, %v375
    %v387 = vpack.c.b16 %v378, %v377
    %v388 = vpack.c.b16 %v380, %v379
    %397 = vmatprep.subr.bf16.mxu0 0
    %398 = vmatpush1.bf16.msra.mxu0 %v381
    %399 = vmatprep.subr.bf16.mxu0 0
    %400 = vmatpush1.bf16.msra.mxu0 %v382
    %401 = vmatprep.subr.bf16.mxu0 0
    %402 = vmatpush1.bf16.msra.mxu0 %v383
    %403 = vmatprep.subr.bf16.mxu0 0
    %404 = vmatpush1.bf16.msra.mxu0 %v384
    %405 = vmatprep.subr.bf16.mxu0 0
    %406 = vmatpush1.bf16.msra.mxu0 %v385
    %407 = vmatprep.subr.bf16.mxu0 0
    %408 = vmatpush1.bf16.msra.mxu0 %v386
    %409 = vmatprep.subr.bf16.mxu0 0
    %410 = vmatpush1.bf16.msra.mxu0 %v387
    %411 = vmatprep.subr.bf16.mxu0 0
    %412 = vmatpush1.bf16.msra.mxu0 %v388
    %413 = vmatprep.subr.bf16.mxu0 0
    %414 = vmatpush1.bf16.msra.mxu0 0
    %415 = vmatprep.subr.bf16.mxu0 0
    %416 = vmatpush1.bf16.msra.mxu0 0
    %417 = vmatprep.subr.bf16.mxu0 0
    %418 = vmatpush1.bf16.msra.mxu0 0
    %419 = vmatprep.subr.bf16.mxu0 0
    %420 = vmatpush1.bf16.msra.mxu0 0
    %421 = vmatprep.subr.bf16.mxu0 0
    %422 = vmatpush1.bf16.msra.mxu0 0
    %423 = vmatprep.subr.bf16.mxu0 0
    %424 = vmatpush1.bf16.msra.mxu0 0
    %425 = vmatprep.subr.bf16.mxu0 0
    %426 = vmatpush1.bf16.msra.mxu0 0
    %427 = vmatprep.subr.bf16.mxu0 0
    %428 = vmatpush1.bf16.msra.mxu0 0
    %429 = vmatprep.mubr.bf16.mxu0 0
    %430 = vmatmul.mubr.bf16.gmra.mrb[0].mxu0 %v344
    %v431 = vpop.f32.mrb[0].mxu0
    %v432 = vadd.f32 %v348, %v431
    %v433 = vpop.f32.mrb[0].mxu0
    %v434 = vpop.f32.mrb[0].mxu0
    %v435 = vpop.f32.mrb[0].mxu0
    %436 = vdwg.mxu0
    %437 = vmax.xlane.f32.xlu0 %v432
    %v438 = vpop.xlane.xlu0 %437
    %v439 = vsub.f32 %v432, %v438
    %v440 = vmul.f32 %v439, 1.442695
    %v441 = vpow.pop %v440
    %442 = vadd.xlane.f32.xlu0 %v441
    %v443 = vpop.xlane.xlu0 %442
    %v444 = vrcp.pop %v443
    %v445 = vmul.f32 %v443, %v444
    %v446 = vsub.f32 2.0, %v445
    %v447 = vmul.f32 %v444, %v446
    %v448 = vmul.f32 %v441, %v447
    %449 = vst [vmem:[#allocation8] sm:$0xff] %v448
    // Predicated region
    $region26: #{tpu_custom_call.1} parent=1 // pred_check
      _
    $region27: #{tpu_custom_call.1} parent=1 // pred_check_branch
      %451 = sbr.rel (0) target = $region29
    $region28: #{tpu_custom_call.1} parent=1 // pred_region
      %s453 = ssub.s32 128, 128
      %454 = vsyncadd [#allocation4], %s453
      %s456 = sshll.u32 [#allocation8], 4
      %s457 = int_to_ptr.vmem [resolvable:$true] %s456
      %459 = dma.vmem_to_hbm [thread:$0]  %s457, 128, %s3, [#allocation4]
    $region29: #{tpu_custom_call.1} parent=1 // pred_fallthru
      _
    // Predicated region
    $region30: #{tpu_custom_call.1} parent=1 // pred_check
      _
    $region31: #{tpu_custom_call.1} parent=1 // pred_check_branch
      %461 = sbr.rel (0) target = $region33
    $region32: #{tpu_custom_call.1} parent=1 // pred_region
      %462 = dma.done [#allocation4], 128
    $region33: #{tpu_custom_call.1} parent=1 // pred_fallthru
      _
    %463 = vsyncpa [#allocation3], 1
    %464 = vsyncpa [#allocation6], 1
    %465 = vsyncpa [#allocation4], 1

</llo_original>
